<compile_context>
chip_gen: v5e
topology: v5e:2x2
jax: 0.10.0
libtpu: 0.0.40
codegen_flags: <defaults>
</compile_context>

<pallas_src>
import functools

import jax
import jax.numpy as jnp
import numpy as np
from jax import lax
from jax.experimental import pallas as pl
from jax.experimental.pallas import tpu as pltpu


# ---------------------------------------------------------------------------
# Downsample (pure permutation):  (B, C, H, W) -> (B, C*d^2, H/d, W/d)
#   out[b, c*d^2 + hn*d + wn, hd*d + hh, wd*d + ww]
#       = x[b, c, hd*d^2 + hn*d + hh, wd*d^2 + wn*d + ww]
# ---------------------------------------------------------------------------
def _downsample_mats(H, W, d, dtype):
    H2, W2 = H // d, W // d
    Q = np.zeros((d, H2, H), np.float32)            # row selection, one per hn
    for hn in range(d):
        for hd in range(H // (d * d)):
            for hh in range(d):
                Q[hn, hd * d + hh, hd * d * d + hn * d + hh] = 1.0
    P = np.zeros((d, W, W2), np.float32)            # column selection, one per wn
    for wn in range(d):
        for wd in range(W // (d * d)):
            for ww in range(d):
                P[wn, wd * d * d + wn * d + ww, wd * d + ww] = 1.0
    return jnp.asarray(Q, dtype), jnp.asarray(P, dtype)


def _downsample_kernel(x_ref, q_ref, p_ref, o_ref, *, C, d):
    # x_ref: (1, C, H, W)  q_ref: (d, H/d, H)  p_ref: (d, W, W/d)
    # o_ref: (1, C*d*d, H/d, W/d)
    for c in range(C):                                   # static, small
        xc = x_ref[0, c]                                 # (H, W)
        for hn in range(d):
            # Hoisted row permutation: shared by every wn (d Q-matmuls / channel).
            t = jnp.dot(q_ref[hn], xc,
                        preferred_element_type=jnp.float32).astype(xc.dtype)
            for wn in range(d):
                # Disjoint output planes: store directly, no accumulator.
                o_ref[0, c * d * d + hn * d + wn] = jnp.dot(
                    t, p_ref[wn],
                    preferred_element_type=jnp.float32).astype(o_ref.dtype)


def downsample_pallas(x, d=2):
    B, C, H, W = x.shape
    assert H % (d * d) == 0 and W % (d * d) == 0
    H2, W2 = H // d, W // d
    mat_dtype = x.dtype if x.dtype == jnp.bfloat16 else jnp.float32
    Q, P = _downsample_mats(H, W, d, mat_dtype)
    kernel = functools.partial(_downsample_kernel, C=C, d=d)
    return pl.pallas_call(
        kernel,
        out_shape=jax.ShapeDtypeStruct((B, C * d * d, H2, W2), x.dtype),
        grid_spec=pltpu.PrefetchScalarGridSpec(
            num_scalar_prefetch=0,
            grid=(B,),
            in_specs=[
                pl.BlockSpec((1, C, H, W), lambda b: (b, 0, 0, 0)),
                pl.BlockSpec((d, H2, H), lambda b: (0, 0, 0)),
                pl.BlockSpec((d, W, W2), lambda b: (0, 0, 0)),
            ],
            out_specs=pl.BlockSpec((1, C * d * d, H2, W2),
                                   lambda b: (b, 0, 0, 0)),
        ),
        compiler_params=pltpu.CompilerParams(
            dimension_semantics=("parallel",)),
    )(x, Q, P)


# ---------------------------------------------------------------------------
# Dilated KxK / 1x1 convolution in pixel-major layout (channels on lanes).
#   x_pm : (B, H*W, Cin) -> out (B, H*W, Cout)
# The wrapper pads the image and builds KW column-shifted copies so that every
# tap (kh, kw) is a contiguous, sublane-aligned slab
#       xsh[b, kw, kh*r*W : kh*r*W + H*W, :]
# and the conv becomes a sum of KH*KW MXU matmuls.  Bias / ReLU / residual adds
# are fused.  groups=2 is handled with static lane slices.
# ---------------------------------------------------------------------------
def _conv_kernel(x_ref, w_ref, b_ref, *rest, W, KH, KW, r, groups, relu):
    # x_ref: (1, KW, Hp*W, Cin)   tap-shifted, padded, flattened input
    # w_ref: (KH*KW, groups, Cin_g, Cout_g)     b_ref: (1, Cout)
    # rest : n_res residual refs then the output ref, all (1, H*W, Cout)
    *res_refs, o_ref = rest
    P = o_ref.shape[1]
    cin_g = w_ref.shape[2]
    cout_g = w_ref.shape[3]
    for g in range(groups):
        acc = jnp.zeros((P, cout_g), jnp.float32)
        for kh in range(KH):
            off = kh * r * W
            for kw in range(KW):
                slab = x_ref[0, kw, off:off + P, g * cin_g:(g + 1) * cin_g]
                acc = acc + jnp.dot(slab, w_ref[kh * KW + kw, g],
                                    preferred_element_type=jnp.float32)
        acc = acc + b_ref[:, g * cout_g:(g + 1) * cout_g].astype(jnp.float32)
        if relu:
            acc = jnp.maximum(acc, 0.0)
        for rres in res_refs:
            acc = acc + rres[0, :, g * cout_g:(g + 1) * cout_g].astype(jnp.float32)
        o_ref[0, :, g * cout_g:(g + 1) * cout_g] = acc.astype(o_ref.dtype)


def conv2d_pm(x_pm, w, b, *, H, W, dilation, groups=1, relu=False, residuals=()):
    B, Pn, Cin = x_pm.shape
    assert Pn == H * W
    Cout, cin_g, KH, KW = w.shape
    assert cin_g == Cin // groups
    r = dilation
    pad = dilation * (KH - 1) // 2          # module: pad=dilation for 3x3, 0 for 1x1
    Hp = H + 2 * pad

    x4 = x_pm.reshape(B, H, W, Cin)
    if pad:
        x4 = jnp.pad(x4, ((0, 0), (pad, pad), (pad, pad), (0, 0)))
    if KW == 1:
        xsh = x4[:, None]                                        # (B, 1, H, W, Cin)
    else:
        xsh = jnp.stack([x4[:, :, kw * r:kw * r + W, :] for kw in range(KW)],
                        axis=1)                                  # (B, KW, Hp, W, Cin)
    xsh = xsh.reshape(B, KW, Hp * W, Cin)

    cout_g = Cout // groups
    wk = (w.reshape(groups, cout_g, cin_g, KH, KW)
           .transpose(3, 4, 0, 2, 1)
           .reshape(KH * KW, groups, cin_g, cout_g))
    b2 = b.reshape(1, Cout)

    kernel = functools.partial(_conv_kernel, W=W, KH=KH, KW=KW, r=r,
                               groups=groups, relu=relu)
    res_specs = [pl.BlockSpec((1, H * W, Cout), lambda bi: (bi, 0, 0))
                 for _ in residuals]
    return pl.pallas_call(
        kernel,
        out_shape=jax.ShapeDtypeStruct((B, H * W, Cout), x_pm.dtype),
        grid_spec=pltpu.PrefetchScalarGridSpec(
            num_scalar_prefetch=0,
            grid=(B,),
            in_specs=[
                pl.BlockSpec((1, KW, Hp * W, Cin), lambda bi: (bi, 0, 0, 0)),
                pl.BlockSpec((KH * KW, groups, cin_g, cout_g),
                             lambda bi: (0, 0, 0, 0)),
                pl.BlockSpec((1, Cout), lambda bi: (0, 0)),
            ] + res_specs,
            out_specs=pl.BlockSpec((1, H * W, Cout), lambda bi: (bi, 0, 0)),
        ),
        compiler_params=pltpu.CompilerParams(
            dimension_semantics=("parallel",)),
    )(xsh, wk, b2, *residuals)


# ---------------------------------------------------------------------------
# Encoder forward (Pallas) — Downsample x2, then fusion (head/body/tail convs).
# Layout plumbing (transpose / pad / concat) is wrapper glue.
# ---------------------------------------------------------------------------
def nchw_to_pm(x):
    B, C, H, W = x.shape
    return jnp.transpose(x, (0, 2, 3, 1)).reshape(B, H * W, C)


def pm_to_nchw(x, H, W):
    B, _, C = x.shape
    return jnp.transpose(x.reshape(B, H, W, C), (0, 3, 1, 2))


def encoder_forward(x1, x2, params, *, dilation=2, n_resgroups=2, n_resblocks=2):
    f1 = downsample_pallas(x1, dilation)
    f2 = downsample_pallas(x2, dilation)
    _, _, H2, W2 = f1.shape
    x = jnp.concatenate([nchw_to_pm(f1), nchw_to_pm(f2)], axis=-1)

    cur = conv2d_pm(x, params["head_w"], params["head_b"], H=H2, W=W2, dilation=2)
    for g in range(n_resgroups):
        gin = cur
        for i in range(n_resblocks):
            blk = params["body"][g][i]
            rin = cur
            y = conv2d_pm(cur, blk["dc_w"], blk["dc_b"], H=H2, W=W2,
                          dilation=2, groups=2, relu=True)
            # RCAB residual; the ResidualGroup residual is fused into the last block.
            res = (rin, gin) if i == n_resblocks - 1 else (rin,)
            cur = conv2d_pm(y, blk["pw_w"], blk["pw_b"], H=H2, W=W2,
                            dilation=1, residuals=res)
    out = conv2d_pm(cur, params["tail0_w"], params["tail0_b"], H=H2, W=W2, dilation=2)
    out = conv2d_pm(out, params["tail1_w"], params["tail1_b"], H=H2, W=W2, dilation=1)
    out = conv2d_pm(out, params["tail2_w"], params["tail2_b"], H=H2, W=W2, dilation=1)
    return pm_to_nchw(out, H2, W2)


# ---------------------------------------------------------------------------
# Pure-JAX reference (faithful transcription of the PyTorch module).
# ---------------------------------------------------------------------------
def downsample_reference(x, d=2):
    B, C, H, W = x.shape
    hd, wd = H // (d * d), W // (d * d)
    x1 = x.reshape(B, C, hd, d * d, wd, d * d)
    x1 = jnp.transpose(x1, (0, 1, 2, 4, 3, 5)).reshape(B, C * hd * wd, d * d, d * d)
    x2 = x1.reshape(B, C * hd * wd, d, d, d, d)
    x2 = jnp.transpose(x2, (0, 1, 2, 4, 3, 5)).reshape(B, C * hd * wd, d * d, d, d)
    x3 = x2.reshape(B, C, hd, wd, d * d, d, d)
    x3 = jnp.transpose(x3, (0, 1, 4, 2, 5, 3, 6))
    return x3.reshape(B, C * d * d, hd * d, wd * d)


def _conv_ref(x, w, b, *, dilation, padding, groups=1):
    out = lax.conv_general_dilated(
        x, w, window_strides=(1, 1),
        padding=((padding, padding), (padding, padding)),
        rhs_dilation=(dilation, dilation),
        dimension_numbers=("NCHW", "OIHW", "NCHW"),
        feature_group_count=groups,
        precision=lax.Precision.HIGHEST)
    return out + b[None, :, None, None]


def encoder_reference(x1, x2, params, *, dilation=2, n_resgroups=2, n_resblocks=2):
    f1 = downsample_reference(x1, dilation)
    f2 = downsample_reference(x2, dilation)
    x = jnp.concatenate([f1, f2], axis=1)
    cur = _conv_ref(x, params["head_w"], params["head_b"], dilation=2, padding=2)
    for g in range(n_resgroups):
        gin = cur
        for i in range(n_resblocks):
            blk = params["body"][g][i]
            y = _conv_ref(cur, blk["dc_w"], blk["dc_b"], dilation=2, padding=2, groups=2)
            y = jnp.maximum(y, 0.0)
            y = _conv_ref(y, blk["pw_w"], blk["pw_b"], dilation=1, padding=0)
            cur = y + cur
        cur = cur + gin
    out = _conv_ref(cur, params["tail0_w"], params["tail0_b"], dilation=2, padding=2)
    out = _conv_ref(out, params["tail1_w"], params["tail1_b"], dilation=1, padding=0)
    out = _conv_ref(out, params["tail2_w"], params["tail2_b"], dilation=1, padding=0)
    return out


def init_params(key, n_feats, n_resgroups, n_resblocks, dtype=jnp.float32):
    def _w(k, cout, cin_g, ksz):
        return 0.1 * jax.random.normal(k, (cout, cin_g, ksz, ksz), dtype)

    def _b(k, cout):
        return 0.1 * jax.random.normal(k, (cout,), dtype)

    keys = iter(jax.random.split(key, 2 + 4 * n_resgroups * n_resblocks + 6))
    params = {"head_w": _w(next(keys), n_feats, 2 * n_feats, 3),
              "head_b": _b(next(keys), n_feats)}
    body = []
    for _ in range(n_resgroups):
        blocks = []
        for _ in range(n_resblocks):
            blocks.append({
                "dc_w": _w(next(keys), n_feats, n_feats // 2, 3),   # groups=2
                "dc_b": _b(next(keys), n_feats),
                "pw_w": _w(next(keys), n_feats, n_feats, 1),
                "pw_b": _b(next(keys), n_feats),
            })
        body.append(blocks)
    params["body"] = body
    params["tail0_w"] = _w(next(keys), n_feats, n_feats, 3)
    params["tail0_b"] = _b(next(keys), n_feats)
    params["tail1_w"] = _w(next(keys), n_feats, n_feats, 1)
    params["tail1_b"] = _b(next(keys), n_feats)
    params["tail2_w"] = _w(next(keys), n_feats, n_feats, 1)
    params["tail2_b"] = _b(next(keys), n_feats)
    return params


if __name__ == "__main__":
    # Small but self-consistent Encoder configuration:
    #   in_channels=4, depth=1  ->  n_feats = in_channels * 4**depth = 16
    #   inputs carry n_feats // 4 = 4 channels so that
    #   cat(Downsample(x1), Downsample(x2)) has 2 * n_feats channels for headConv.
    in_channels, depth = 4, 1
    n_resgroups, n_resblocks = 2, 2
    n_feats = in_channels * 4 ** depth                  # 16
    B, C_in, H, W = 2, n_feats // 4, 16, 16             # x1, x2: (2, 4, 16, 16)

    key = jax.random.PRNGKey(0)
    k_x1, k_x2, k_p = jax.random.split(key, 3)
    x1 = jax.random.normal(k_x1, (B, C_in, H, W), dtype=jnp.float32)
    x2 = jax.random.normal(k_x2, (B, C_in, H, W), dtype=jnp.float32)
    params = init_params(k_p, n_feats, n_resgroups, n_resblocks)

    # --- Downsample kernel: exact permutation check -------------------------
    ds = jax.block_until_ready(downsample_pallas(x1, 2))
    ds_ref = downsample_reference(x1, 2)
    assert ds.shape == (B, 4 * C_in, H // 2, W // 2), ds.shape
    assert jnp.allclose(ds, ds_ref, atol=1e-5, rtol=1e-5), "Downsample mismatch"

    # --- Full Encoder forward ------------------------------------------------
    fwd = jax.jit(functools.partial(encoder_forward, dilation=2,
                                    n_resgroups=n_resgroups,
                                    n_resblocks=n_resblocks))
    out = jax.block_until_ready(fwd(x1, x2, params))
    ref = encoder_reference(x1, x2, params,
                            n_resgroups=n_resgroups, n_resblocks=n_resblocks)
    assert out.shape == (B, n_feats, H // 2, W // 2), out.shape
    rel_err = float(jnp.max(jnp.abs(out - ref)) / (jnp.max(jnp.abs(ref)) + 1e-8))
    assert rel_err < 2e-3, f"Encoder mismatch, rel err {rel_err}"

    print("KERNEL_OK")
</pallas_src>

<mosaic_0001>
module attributes {stable_mosaic.version = 11 : i64} {
  func.func @_downsample_kernel(%arg0: i32, %arg1: memref<1x4x16x16xf32, #tpu.memory_space<vmem>>, %arg2: memref<2x8x16xf32, #tpu.memory_space<vmem>>, %arg3: memref<2x16x8xf32, #tpu.memory_space<vmem>>, %arg4: memref<1x16x8x8xf32, #tpu.memory_space<vmem>>) attributes {dimension_semantics = [#tpu.dimension_semantics<parallel>], iteration_bounds = array<i64: 2>, scalar_prefetch = 0 : i64, scratch_operands = 0 : i64, tpu.core_type = #tpu.core_type<tc>, window_params = [{transform_indices = @transform_0, window_bounds = array<i64: 1, 4, 16, 16>}, {pipeline_mode = #tpu.pipeline_mode<synchronous>, transform_indices = @transform_1, window_bounds = array<i64: 2, 8, 16>}, {pipeline_mode = #tpu.pipeline_mode<synchronous>, transform_indices = @transform_2, window_bounds = array<i64: 2, 16, 8>}, {transform_indices = @transform_3, window_bounds = array<i64: 1, 16, 8, 8>}]} {
    %c0 = arith.constant 0 : index
    %c0_0 = arith.constant 0 : index
    %c0_1 = arith.constant 0 : index
    %c0_2 = arith.constant 0 : index
    %0 = vector.load %arg1[%c0, %c0_0, %c0_1, %c0_2] : memref<1x4x16x16xf32, #tpu.memory_space<vmem>>, vector<1x1x16x16xf32>
    %1 = vector.shape_cast %0 : vector<1x1x16x16xf32> to vector<16x16xf32>
    %c0_3 = arith.constant 0 : index
    %c0_4 = arith.constant 0 : index
    %c0_5 = arith.constant 0 : index
    %2 = vector.load %arg2[%c0_3, %c0_4, %c0_5] : memref<2x8x16xf32, #tpu.memory_space<vmem>>, vector<1x8x16xf32>
    %3 = vector.shape_cast %2 : vector<1x8x16xf32> to vector<8x16xf32>
    %cst = arith.constant dense<0.000000e+00> : vector<8x16xf32>
    %4 = tpu.matmul %3, %1, %cst {dimension_numbers = #tpu.dot_dimension_numbers<[1], [0], [0], [1], [0, 0, 1, 1], [], []>} : vector<8x16xf32>, vector<16x16xf32>, vector<8x16xf32> -> vector<8x16xf32>
    %c0_6 = arith.constant 0 : index
    %c0_7 = arith.constant 0 : index
    %c0_8 = arith.constant 0 : index
    %5 = vector.load %arg3[%c0_6, %c0_7, %c0_8] : memref<2x16x8xf32, #tpu.memory_space<vmem>>, vector<1x16x8xf32>
    %6 = vector.shape_cast %5 : vector<1x16x8xf32> to vector<16x8xf32>
    %cst_9 = arith.constant dense<0.000000e+00> : vector<8x8xf32>
    %7 = tpu.matmul %4, %6, %cst_9 {dimension_numbers = #tpu.dot_dimension_numbers<[1], [0], [0], [1], [0, 0, 1, 1], [], []>} : vector<8x16xf32>, vector<16x8xf32>, vector<8x8xf32> -> vector<8x8xf32>
    %c0_10 = arith.constant 0 : index
    %c0_11 = arith.constant 0 : index
    %c0_12 = arith.constant 0 : index
    %c0_13 = arith.constant 0 : index
    %8 = vector.load %arg4[%c0_10, %c0_11, %c0_12, %c0_13] : memref<1x16x8x8xf32, #tpu.memory_space<vmem>>, vector<1x1x8x8xf32>
    %9 = vector.shape_cast %8 : vector<1x1x8x8xf32> to vector<8x8xf32>
    %10 = vector.shape_cast %7 : vector<8x8xf32> to vector<1x1x8x8xf32>
    tpu.vector_store %arg4[%c0_10, %c0_11, %c0_12, %c0_13], %10 {strides = array<i32>} : memref<1x16x8x8xf32, #tpu.memory_space<vmem>>, vector<1x1x8x8xf32>,
    %c1 = arith.constant 1 : index
    %c0_14 = arith.constant 0 : index
    %c0_15 = arith.constant 0 : index
    %11 = vector.load %arg3[%c1, %c0_14, %c0_15] : memref<2x16x8xf32, #tpu.memory_space<vmem>>, vector<1x16x8xf32>
    %12 = vector.shape_cast %11 : vector<1x16x8xf32> to vector<16x8xf32>
    %cst_16 = arith.constant dense<0.000000e+00> : vector<8x8xf32>
    %13 = tpu.matmul %4, %12, %cst_16 {dimension_numbers = #tpu.dot_dimension_numbers<[1], [0], [0], [1], [0, 0, 1, 1], [], []>} : vector<8x16xf32>, vector<16x8xf32>, vector<8x8xf32> -> vector<8x8xf32>
    %c0_17 = arith.constant 0 : index
    %c1_18 = arith.constant 1 : index
    %c0_19 = arith.constant 0 : index
    %c0_20 = arith.constant 0 : index
    %14 = vector.load %arg4[%c0_17, %c1_18, %c0_19, %c0_20] : memref<1x16x8x8xf32, #tpu.memory_space<vmem>>, vector<1x1x8x8xf32>
    %15 = vector.shape_cast %14 : vector<1x1x8x8xf32> to vector<8x8xf32>
    %16 = vector.shape_cast %13 : vector<8x8xf32> to vector<1x1x8x8xf32>
    tpu.vector_store %arg4[%c0_17, %c1_18, %c0_19, %c0_20], %16 {strides = array<i32>} : memref<1x16x8x8xf32, #tpu.memory_space<vmem>>, vector<1x1x8x8xf32>,
    %c1_21 = arith.constant 1 : index
    %c0_22 = arith.constant 0 : index
    %c0_23 = arith.constant 0 : index
    %17 = vector.load %arg2[%c1_21, %c0_22, %c0_23] : memref<2x8x16xf32, #tpu.memory_space<vmem>>, vector<1x8x16xf32>
    %18 = vector.shape_cast %17 : vector<1x8x16xf32> to vector<8x16xf32>
    %cst_24 = arith.constant dense<0.000000e+00> : vector<8x16xf32>
    %19 = tpu.matmul %18, %1, %cst_24 {dimension_numbers = #tpu.dot_dimension_numbers<[1], [0], [0], [1], [0, 0, 1, 1], [], []>} : vector<8x16xf32>, vector<16x16xf32>, vector<8x16xf32> -> vector<8x16xf32>
    %c0_25 = arith.constant 0 : index
    %c0_26 = arith.constant 0 : index
    %c0_27 = arith.constant 0 : index
    %20 = vector.load %arg3[%c0_25, %c0_26, %c0_27] : memref<2x16x8xf32, #tpu.memory_space<vmem>>, vector<1x16x8xf32>
    %21 = vector.shape_cast %20 : vector<1x16x8xf32> to vector<16x8xf32>
    %cst_28 = arith.constant dense<0.000000e+00> : vector<8x8xf32>
    %22 = tpu.matmul %19, %21, %cst_28 {dimension_numbers = #tpu.dot_dimension_numbers<[1], [0], [0], [1], [0, 0, 1, 1], [], []>} : vector<8x16xf32>, vector<16x8xf32>, vector<8x8xf32> -> vector<8x8xf32>
    %c0_29 = arith.constant 0 : index
    %c2 = arith.constant 2 : index
    %c0_30 = arith.constant 0 : index
    %c0_31 = arith.constant 0 : index
    %23 = vector.load %arg4[%c0_29, %c2, %c0_30, %c0_31] : memref<1x16x8x8xf32, #tpu.memory_space<vmem>>, vector<1x1x8x8xf32>
    %24 = vector.shape_cast %23 : vector<1x1x8x8xf32> to vector<8x8xf32>
    %25 = vector.shape_cast %22 : vector<8x8xf32> to vector<1x1x8x8xf32>
    tpu.vector_store %arg4[%c0_29, %c2, %c0_30, %c0_31], %25 {strides = array<i32>} : memref<1x16x8x8xf32, #tpu.memory_space<vmem>>, vector<1x1x8x8xf32>,
    %c1_32 = arith.constant 1 : index
    %c0_33 = arith.constant 0 : index
    %c0_34 = arith.constant 0 : index
    %26 = vector.load %arg3[%c1_32, %c0_33, %c0_34] : memref<2x16x8xf32, #tpu.memory_space<vmem>>, vector<1x16x8xf32>
    %27 = vector.shape_cast %26 : vector<1x16x8xf32> to vector<16x8xf32>
    %cst_35 = arith.constant dense<0.000000e+00> : vector<8x8xf32>
    %28 = tpu.matmul %19, %27, %cst_35 {dimension_numbers = #tpu.dot_dimension_numbers<[1], [0], [0], [1], [0, 0, 1, 1], [], []>} : vector<8x16xf32>, vector<16x8xf32>, vector<8x8xf32> -> vector<8x8xf32>
    %c0_36 = arith.constant 0 : index
    %c3 = arith.constant 3 : index
    %c0_37 = arith.constant 0 : index
    %c0_38 = arith.constant 0 : index
    %29 = vector.load %arg4[%c0_36, %c3, %c0_37, %c0_38] : memref<1x16x8x8xf32, #tpu.memory_space<vmem>>, vector<1x1x8x8xf32>
    %30 = vector.shape_cast %29 : vector<1x1x8x8xf32> to vector<8x8xf32>
    %31 = vector.shape_cast %28 : vector<8x8xf32> to vector<1x1x8x8xf32>
    tpu.vector_store %arg4[%c0_36, %c3, %c0_37, %c0_38], %31 {strides = array<i32>} : memref<1x16x8x8xf32, #tpu.memory_space<vmem>>, vector<1x1x8x8xf32>,
    %c0_39 = arith.constant 0 : index
    %c1_40 = arith.constant 1 : index
    %c0_41 = arith.constant 0 : index
    %c0_42 = arith.constant 0 : index
    %32 = vector.load %arg1[%c0_39, %c1_40, %c0_41, %c0_42] : memref<1x4x16x16xf32, #tpu.memory_space<vmem>>, vector<1x1x16x16xf32>
    %33 = vector.shape_cast %32 : vector<1x1x16x16xf32> to vector<16x16xf32>
    %c0_43 = arith.constant 0 : index
    %c0_44 = arith.constant 0 : index
    %c0_45 = arith.constant 0 : index
    %34 = vector.load %arg2[%c0_43, %c0_44, %c0_45] : memref<2x8x16xf32, #tpu.memory_space<vmem>>, vector<1x8x16xf32>
    %35 = vector.shape_cast %34 : vector<1x8x16xf32> to vector<8x16xf32>
    %cst_46 = arith.constant dense<0.000000e+00> : vector<8x16xf32>
    %36 = tpu.matmul %35, %33, %cst_46 {dimension_numbers = #tpu.dot_dimension_numbers<[1], [0], [0], [1], [0, 0, 1, 1], [], []>} : vector<8x16xf32>, vector<16x16xf32>, vector<8x16xf32> -> vector<8x16xf32>
    %c0_47 = arith.constant 0 : index
    %c0_48 = arith.constant 0 : index
    %c0_49 = arith.constant 0 : index
    %37 = vector.load %arg3[%c0_47, %c0_48, %c0_49] : memref<2x16x8xf32, #tpu.memory_space<vmem>>, vector<1x16x8xf32>
    %38 = vector.shape_cast %37 : vector<1x16x8xf32> to vector<16x8xf32>
    %cst_50 = arith.constant dense<0.000000e+00> : vector<8x8xf32>
    %39 = tpu.matmul %36, %38, %cst_50 {dimension_numbers = #tpu.dot_dimension_numbers<[1], [0], [0], [1], [0, 0, 1, 1], [], []>} : vector<8x16xf32>, vector<16x8xf32>, vector<8x8xf32> -> vector<8x8xf32>
    %c0_51 = arith.constant 0 : index
    %c4 = arith.constant 4 : index
    %c0_52 = arith.constant 0 : index
    %c0_53 = arith.constant 0 : index
    %40 = vector.load %arg4[%c0_51, %c4, %c0_52, %c0_53] : memref<1x16x8x8xf32, #tpu.memory_space<vmem>>, vector<1x1x8x8xf32>
    %41 = vector.shape_cast %40 : vector<1x1x8x8xf32> to vector<8x8xf32>
    %42 = vector.shape_cast %39 : vector<8x8xf32> to vector<1x1x8x8xf32>
    tpu.vector_store %arg4[%c0_51, %c4, %c0_52, %c0_53], %42 {strides = array<i32>} : memref<1x16x8x8xf32, #tpu.memory_space<vmem>>, vector<1x1x8x8xf32>,
    %c1_54 = arith.constant 1 : index
    %c0_55 = arith.constant 0 : index
    %c0_56 = arith.constant 0 : index
    %43 = vector.load %arg3[%c1_54, %c0_55, %c0_56] : memref<2x16x8xf32, #tpu.memory_space<vmem>>, vector<1x16x8xf32>
    %44 = vector.shape_cast %43 : vector<1x16x8xf32> to vector<16x8xf32>
    %cst_57 = arith.constant dense<0.000000e+00> : vector<8x8xf32>
    %45 = tpu.matmul %36, %44, %cst_57 {dimension_numbers = #tpu.dot_dimension_numbers<[1], [0], [0], [1], [0, 0, 1, 1], [], []>} : vector<8x16xf32>, vector<16x8xf32>, vector<8x8xf32> -> vector<8x8xf32>
    %c0_58 = arith.constant 0 : index
    %c5 = arith.constant 5 : index
    %c0_59 = arith.constant 0 : index
    %c0_60 = arith.constant 0 : index
    %46 = vector.load %arg4[%c0_58, %c5, %c0_59, %c0_60] : memref<1x16x8x8xf32, #tpu.memory_space<vmem>>, vector<1x1x8x8xf32>
    %47 = vector.shape_cast %46 : vector<1x1x8x8xf32> to vector<8x8xf32>
    %48 = vector.shape_cast %45 : vector<8x8xf32> to vector<1x1x8x8xf32>
    tpu.vector_store %arg4[%c0_58, %c5, %c0_59, %c0_60], %48 {strides = array<i32>} : memref<1x16x8x8xf32, #tpu.memory_space<vmem>>, vector<1x1x8x8xf32>,
    %c1_61 = arith.constant 1 : index
    %c0_62 = arith.constant 0 : index
    %c0_63 = arith.constant 0 : index
    %49 = vector.load %arg2[%c1_61, %c0_62, %c0_63] : memref<2x8x16xf32, #tpu.memory_space<vmem>>, vector<1x8x16xf32>
    %50 = vector.shape_cast %49 : vector<1x8x16xf32> to vector<8x16xf32>
    %cst_64 = arith.constant dense<0.000000e+00> : vector<8x16xf32>
    %51 = tpu.matmul %50, %33, %cst_64 {dimension_numbers = #tpu.dot_dimension_numbers<[1], [0], [0], [1], [0, 0, 1, 1], [], []>} : vector<8x16xf32>, vector<16x16xf32>, vector<8x16xf32> -> vector<8x16xf32>
    %c0_65 = arith.constant 0 : index
    %c0_66 = arith.constant 0 : index
    %c0_67 = arith.constant 0 : index
    %52 = vector.load %arg3[%c0_65, %c0_66, %c0_67] : memref<2x16x8xf32, #tpu.memory_space<vmem>>, vector<1x16x8xf32>
    %53 = vector.shape_cast %52 : vector<1x16x8xf32> to vector<16x8xf32>
    %cst_68 = arith.constant dense<0.000000e+00> : vector<8x8xf32>
    %54 = tpu.matmul %51, %53, %cst_68 {dimension_numbers = #tpu.dot_dimension_numbers<[1], [0], [0], [1], [0, 0, 1, 1], [], []>} : vector<8x16xf32>, vector<16x8xf32>, vector<8x8xf32> -> vector<8x8xf32>
    %c0_69 = arith.constant 0 : index
    %c6 = arith.constant 6 : index
    %c0_70 = arith.constant 0 : index
    %c0_71 = arith.constant 0 : index
    %55 = vector.load %arg4[%c0_69, %c6, %c0_70, %c0_71] : memref<1x16x8x8xf32, #tpu.memory_space<vmem>>, vector<1x1x8x8xf32>
    %56 = vector.shape_cast %55 : vector<1x1x8x8xf32> to vector<8x8xf32>
    %57 = vector.shape_cast %54 : vector<8x8xf32> to vector<1x1x8x8xf32>
    tpu.vector_store %arg4[%c0_69, %c6, %c0_70, %c0_71], %57 {strides = array<i32>} : memref<1x16x8x8xf32, #tpu.memory_space<vmem>>, vector<1x1x8x8xf32>,
    %c1_72 = arith.constant 1 : index
    %c0_73 = arith.constant 0 : index
    %c0_74 = arith.constant 0 : index
    %58 = vector.load %arg3[%c1_72, %c0_73, %c0_74] : memref<2x16x8xf32, #tpu.memory_space<vmem>>, vector<1x16x8xf32>
    %59 = vector.shape_cast %58 : vector<1x16x8xf32> to vector<16x8xf32>
    %cst_75 = arith.constant dense<0.000000e+00> : vector<8x8xf32>
    %60 = tpu.matmul %51, %59, %cst_75 {dimension_numbers = #tpu.dot_dimension_numbers<[1], [0], [0], [1], [0, 0, 1, 1], [], []>} : vector<8x16xf32>, vector<16x8xf32>, vector<8x8xf32> -> vector<8x8xf32>
    %c0_76 = arith.constant 0 : index
    %c7 = arith.constant 7 : index
    %c0_77 = arith.constant 0 : index
    %c0_78 = arith.constant 0 : index
    %61 = vector.load %arg4[%c0_76, %c7, %c0_77, %c0_78] : memref<1x16x8x8xf32, #tpu.memory_space<vmem>>, vector<1x1x8x8xf32>
    %62 = vector.shape_cast %61 : vector<1x1x8x8xf32> to vector<8x8xf32>
    %63 = vector.shape_cast %60 : vector<8x8xf32> to vector<1x1x8x8xf32>
    tpu.vector_store %arg4[%c0_76, %c7, %c0_77, %c0_78], %63 {strides = array<i32>} : memref<1x16x8x8xf32, #tpu.memory_space<vmem>>, vector<1x1x8x8xf32>,
    %c0_79 = arith.constant 0 : index
    %c2_80 = arith.constant 2 : index
    %c0_81 = arith.constant 0 : index
    %c0_82 = arith.constant 0 : index
    %64 = vector.load %arg1[%c0_79, %c2_80, %c0_81, %c0_82] : memref<1x4x16x16xf32, #tpu.memory_space<vmem>>, vector<1x1x16x16xf32>
    %65 = vector.shape_cast %64 : vector<1x1x16x16xf32> to vector<16x16xf32>
    %c0_83 = arith.constant 0 : index
    %c0_84 = arith.constant 0 : index
    %c0_85 = arith.constant 0 : index
    %66 = vector.load %arg2[%c0_83, %c0_84, %c0_85] : memref<2x8x16xf32, #tpu.memory_space<vmem>>, vector<1x8x16xf32>
    %67 = vector.shape_cast %66 : vector<1x8x16xf32> to vector<8x16xf32>
    %cst_86 = arith.constant dense<0.000000e+00> : vector<8x16xf32>
    %68 = tpu.matmul %67, %65, %cst_86 {dimension_numbers = #tpu.dot_dimension_numbers<[1], [0], [0], [1], [0, 0, 1, 1], [], []>} : vector<8x16xf32>, vector<16x16xf32>, vector<8x16xf32> -> vector<8x16xf32>
    %c0_87 = arith.constant 0 : index
    %c0_88 = arith.constant 0 : index
    %c0_89 = arith.constant 0 : index
    %69 = vector.load %arg3[%c0_87, %c0_88, %c0_89] : memref<2x16x8xf32, #tpu.memory_space<vmem>>, vector<1x16x8xf32>
    %70 = vector.shape_cast %69 : vector<1x16x8xf32> to vector<16x8xf32>
    %cst_90 = arith.constant dense<0.000000e+00> : vector<8x8xf32>
    %71 = tpu.matmul %68, %70, %cst_90 {dimension_numbers = #tpu.dot_dimension_numbers<[1], [0], [0], [1], [0, 0, 1, 1], [], []>} : vector<8x16xf32>, vector<16x8xf32>, vector<8x8xf32> -> vector<8x8xf32>
    %c0_91 = arith.constant 0 : index
    %c8 = arith.constant 8 : index
    %c0_92 = arith.constant 0 : index
    %c0_93 = arith.constant 0 : index
    %72 = vector.load %arg4[%c0_91, %c8, %c0_92, %c0_93] : memref<1x16x8x8xf32, #tpu.memory_space<vmem>>, vector<1x1x8x8xf32>
    %73 = vector.shape_cast %72 : vector<1x1x8x8xf32> to vector<8x8xf32>
    %74 = vector.shape_cast %71 : vector<8x8xf32> to vector<1x1x8x8xf32>
    tpu.vector_store %arg4[%c0_91, %c8, %c0_92, %c0_93], %74 {strides = array<i32>} : memref<1x16x8x8xf32, #tpu.memory_space<vmem>>, vector<1x1x8x8xf32>,
    %c1_94 = arith.constant 1 : index
    %c0_95 = arith.constant 0 : index
    %c0_96 = arith.constant 0 : index
    %75 = vector.load %arg3[%c1_94, %c0_95, %c0_96] : memref<2x16x8xf32, #tpu.memory_space<vmem>>, vector<1x16x8xf32>
    %76 = vector.shape_cast %75 : vector<1x16x8xf32> to vector<16x8xf32>
    %cst_97 = arith.constant dense<0.000000e+00> : vector<8x8xf32>
    %77 = tpu.matmul %68, %76, %cst_97 {dimension_numbers = #tpu.dot_dimension_numbers<[1], [0], [0], [1], [0, 0, 1, 1], [], []>} : vector<8x16xf32>, vector<16x8xf32>, vector<8x8xf32> -> vector<8x8xf32>
    %c0_98 = arith.constant 0 : index
    %c9 = arith.constant 9 : index
    %c0_99 = arith.constant 0 : index
    %c0_100 = arith.constant 0 : index
    %78 = vector.load %arg4[%c0_98, %c9, %c0_99, %c0_100] : memref<1x16x8x8xf32, #tpu.memory_space<vmem>>, vector<1x1x8x8xf32>
    %79 = vector.shape_cast %78 : vector<1x1x8x8xf32> to vector<8x8xf32>
    %80 = vector.shape_cast %77 : vector<8x8xf32> to vector<1x1x8x8xf32>
    tpu.vector_store %arg4[%c0_98, %c9, %c0_99, %c0_100], %80 {strides = array<i32>} : memref<1x16x8x8xf32, #tpu.memory_space<vmem>>, vector<1x1x8x8xf32>,
    %c1_101 = arith.constant 1 : index
    %c0_102 = arith.constant 0 : index
    %c0_103 = arith.constant 0 : index
    %81 = vector.load %arg2[%c1_101, %c0_102, %c0_103] : memref<2x8x16xf32, #tpu.memory_space<vmem>>, vector<1x8x16xf32>
    %82 = vector.shape_cast %81 : vector<1x8x16xf32> to vector<8x16xf32>
    %cst_104 = arith.constant dense<0.000000e+00> : vector<8x16xf32>
    %83 = tpu.matmul %82, %65, %cst_104 {dimension_numbers = #tpu.dot_dimension_numbers<[1], [0], [0], [1], [0, 0, 1, 1], [], []>} : vector<8x16xf32>, vector<16x16xf32>, vector<8x16xf32> -> vector<8x16xf32>
    %c0_105 = arith.constant 0 : index
    %c0_106 = arith.constant 0 : index
    %c0_107 = arith.constant 0 : index
    %84 = vector.load %arg3[%c0_105, %c0_106, %c0_107] : memref<2x16x8xf32, #tpu.memory_space<vmem>>, vector<1x16x8xf32>
    %85 = vector.shape_cast %84 : vector<1x16x8xf32> to vector<16x8xf32>
    %cst_108 = arith.constant dense<0.000000e+00> : vector<8x8xf32>
    %86 = tpu.matmul %83, %85, %cst_108 {dimension_numbers = #tpu.dot_dimension_numbers<[1], [0], [0], [1], [0, 0, 1, 1], [], []>} : vector<8x16xf32>, vector<16x8xf32>, vector<8x8xf32> -> vector<8x8xf32>
    %c0_109 = arith.constant 0 : index
    %c10 = arith.constant 10 : index
    %c0_110 = arith.constant 0 : index
    %c0_111 = arith.constant 0 : index
    %87 = vector.load %arg4[%c0_109, %c10, %c0_110, %c0_111] : memref<1x16x8x8xf32, #tpu.memory_space<vmem>>, vector<1x1x8x8xf32>
    %88 = vector.shape_cast %87 : vector<1x1x8x8xf32> to vector<8x8xf32>
    %89 = vector.shape_cast %86 : vector<8x8xf32> to vector<1x1x8x8xf32>
    tpu.vector_store %arg4[%c0_109, %c10, %c0_110, %c0_111], %89 {strides = array<i32>} : memref<1x16x8x8xf32, #tpu.memory_space<vmem>>, vector<1x1x8x8xf32>,
    %c1_112 = arith.constant 1 : index
    %c0_113 = arith.constant 0 : index
    %c0_114 = arith.constant 0 : index
    %90 = vector.load %arg3[%c1_112, %c0_113, %c0_114] : memref<2x16x8xf32, #tpu.memory_space<vmem>>, vector<1x16x8xf32>
    %91 = vector.shape_cast %90 : vector<1x16x8xf32> to vector<16x8xf32>
    %cst_115 = arith.constant dense<0.000000e+00> : vector<8x8xf32>
    %92 = tpu.matmul %83, %91, %cst_115 {dimension_numbers = #tpu.dot_dimension_numbers<[1], [0], [0], [1], [0, 0, 1, 1], [], []>} : vector<8x16xf32>, vector<16x8xf32>, vector<8x8xf32> -> vector<8x8xf32>
    %c0_116 = arith.constant 0 : index
    %c11 = arith.constant 11 : index
    %c0_117 = arith.constant 0 : index
    %c0_118 = arith.constant 0 : index
    %93 = vector.load %arg4[%c0_116, %c11, %c0_117, %c0_118] : memref<1x16x8x8xf32, #tpu.memory_space<vmem>>, vector<1x1x8x8xf32>
    %94 = vector.shape_cast %93 : vector<1x1x8x8xf32> to vector<8x8xf32>
    %95 = vector.shape_cast %92 : vector<8x8xf32> to vector<1x1x8x8xf32>
    tpu.vector_store %arg4[%c0_116, %c11, %c0_117, %c0_118], %95 {strides = array<i32>} : memref<1x16x8x8xf32, #tpu.memory_space<vmem>>, vector<1x1x8x8xf32>,
    %c0_119 = arith.constant 0 : index
    %c3_120 = arith.constant 3 : index
    %c0_121 = arith.constant 0 : index
    %c0_122 = arith.constant 0 : index
    %96 = vector.load %arg1[%c0_119, %c3_120, %c0_121, %c0_122] : memref<1x4x16x16xf32, #tpu.memory_space<vmem>>, vector<1x1x16x16xf32>
    %97 = vector.shape_cast %96 : vector<1x1x16x16xf32> to vector<16x16xf32>
    %c0_123 = arith.constant 0 : index
    %c0_124 = arith.constant 0 : index
    %c0_125 = arith.constant 0 : index
    %98 = vector.load %arg2[%c0_123, %c0_124, %c0_125] : memref<2x8x16xf32, #tpu.memory_space<vmem>>, vector<1x8x16xf32>
    %99 = vector.shape_cast %98 : vector<1x8x16xf32> to vector<8x16xf32>
    %cst_126 = arith.constant dense<0.000000e+00> : vector<8x16xf32>
    %100 = tpu.matmul %99, %97, %cst_126 {dimension_numbers = #tpu.dot_dimension_numbers<[1], [0], [0], [1], [0, 0, 1, 1], [], []>} : vector<8x16xf32>, vector<16x16xf32>, vector<8x16xf32> -> vector<8x16xf32>
    %c0_127 = arith.constant 0 : index
    %c0_128 = arith.constant 0 : index
    %c0_129 = arith.constant 0 : index
    %101 = vector.load %arg3[%c0_127, %c0_128, %c0_129] : memref<2x16x8xf32, #tpu.memory_space<vmem>>, vector<1x16x8xf32>
    %102 = vector.shape_cast %101 : vector<1x16x8xf32> to vector<16x8xf32>
    %cst_130 = arith.constant dense<0.000000e+00> : vector<8x8xf32>
    %103 = tpu.matmul %100, %102, %cst_130 {dimension_numbers = #tpu.dot_dimension_numbers<[1], [0], [0], [1], [0, 0, 1, 1], [], []>} : vector<8x16xf32>, vector<16x8xf32>, vector<8x8xf32> -> vector<8x8xf32>
    %c0_131 = arith.constant 0 : index
    %c12 = arith.constant 12 : index
    %c0_132 = arith.constant 0 : index
    %c0_133 = arith.constant 0 : index
    %104 = vector.load %arg4[%c0_131, %c12, %c0_132, %c0_133] : memref<1x16x8x8xf32, #tpu.memory_space<vmem>>, vector<1x1x8x8xf32>
    %105 = vector.shape_cast %104 : vector<1x1x8x8xf32> to vector<8x8xf32>
    %106 = vector.shape_cast %103 : vector<8x8xf32> to vector<1x1x8x8xf32>
    tpu.vector_store %arg4[%c0_131, %c12, %c0_132, %c0_133], %106 {strides = array<i32>} : memref<1x16x8x8xf32, #tpu.memory_space<vmem>>, vector<1x1x8x8xf32>,
    %c1_134 = arith.constant 1 : index
    %c0_135 = arith.constant 0 : index
    %c0_136 = arith.constant 0 : index
    %107 = vector.load %arg3[%c1_134, %c0_135, %c0_136] : memref<2x16x8xf32, #tpu.memory_space<vmem>>, vector<1x16x8xf32>
    %108 = vector.shape_cast %107 : vector<1x16x8xf32> to vector<16x8xf32>
    %cst_137 = arith.constant dense<0.000000e+00> : vector<8x8xf32>
    %109 = tpu.matmul %100, %108, %cst_137 {dimension_numbers = #tpu.dot_dimension_numbers<[1], [0], [0], [1], [0, 0, 1, 1], [], []>} : vector<8x16xf32>, vector<16x8xf32>, vector<8x8xf32> -> vector<8x8xf32>
    %c0_138 = arith.constant 0 : index
    %c13 = arith.constant 13 : index
    %c0_139 = arith.constant 0 : index
    %c0_140 = arith.constant 0 : index
    %110 = vector.load %arg4[%c0_138, %c13, %c0_139, %c0_140] : memref<1x16x8x8xf32, #tpu.memory_space<vmem>>, vector<1x1x8x8xf32>
    %111 = vector.shape_cast %110 : vector<1x1x8x8xf32> to vector<8x8xf32>
    %112 = vector.shape_cast %109 : vector<8x8xf32> to vector<1x1x8x8xf32>
    tpu.vector_store %arg4[%c0_138, %c13, %c0_139, %c0_140], %112 {strides = array<i32>} : memref<1x16x8x8xf32, #tpu.memory_space<vmem>>, vector<1x1x8x8xf32>,
    %c1_141 = arith.constant 1 : index
    %c0_142 = arith.constant 0 : index
    %c0_143 = arith.constant 0 : index
    %113 = vector.load %arg2[%c1_141, %c0_142, %c0_143] : memref<2x8x16xf32, #tpu.memory_space<vmem>>, vector<1x8x16xf32>
    %114 = vector.shape_cast %113 : vector<1x8x16xf32> to vector<8x16xf32>
    %cst_144 = arith.constant dense<0.000000e+00> : vector<8x16xf32>
    %115 = tpu.matmul %114, %97, %cst_144 {dimension_numbers = #tpu.dot_dimension_numbers<[1], [0], [0], [1], [0, 0, 1, 1], [], []>} : vector<8x16xf32>, vector<16x16xf32>, vector<8x16xf32> -> vector<8x16xf32>
    %c0_145 = arith.constant 0 : index
    %c0_146 = arith.constant 0 : index
    %c0_147 = arith.constant 0 : index
    %116 = vector.load %arg3[%c0_145, %c0_146, %c0_147] : memref<2x16x8xf32, #tpu.memory_space<vmem>>, vector<1x16x8xf32>
    %117 = vector.shape_cast %116 : vector<1x16x8xf32> to vector<16x8xf32>
    %cst_148 = arith.constant dense<0.000000e+00> : vector<8x8xf32>
    %118 = tpu.matmul %115, %117, %cst_148 {dimension_numbers = #tpu.dot_dimension_numbers<[1], [0], [0], [1], [0, 0, 1, 1], [], []>} : vector<8x16xf32>, vector<16x8xf32>, vector<8x8xf32> -> vector<8x8xf32>
    %c0_149 = arith.constant 0 : index
    %c14 = arith.constant 14 : index
    %c0_150 = arith.constant 0 : index
    %c0_151 = arith.constant 0 : index
    %119 = vector.load %arg4[%c0_149, %c14, %c0_150, %c0_151] : memref<1x16x8x8xf32, #tpu.memory_space<vmem>>, vector<1x1x8x8xf32>
    %120 = vector.shape_cast %119 : vector<1x1x8x8xf32> to vector<8x8xf32>
    %121 = vector.shape_cast %118 : vector<8x8xf32> to vector<1x1x8x8xf32>
    tpu.vector_store %arg4[%c0_149, %c14, %c0_150, %c0_151], %121 {strides = array<i32>} : memref<1x16x8x8xf32, #tpu.memory_space<vmem>>, vector<1x1x8x8xf32>,
    %c1_152 = arith.constant 1 : index
    %c0_153 = arith.constant 0 : index
    %c0_154 = arith.constant 0 : index
    %122 = vector.load %arg3[%c1_152, %c0_153, %c0_154] : memref<2x16x8xf32, #tpu.memory_space<vmem>>, vector<1x16x8xf32>
    %123 = vector.shape_cast %122 : vector<1x16x8xf32> to vector<16x8xf32>
    %cst_155 = arith.constant dense<0.000000e+00> : vector<8x8xf32>
    %124 = tpu.matmul %115, %123, %cst_155 {dimension_numbers = #tpu.dot_dimension_numbers<[1], [0], [0], [1], [0, 0, 1, 1], [], []>} : vector<8x16xf32>, vector<16x8xf32>, vector<8x8xf32> -> vector<8x8xf32>
    %c0_156 = arith.constant 0 : index
    %c15 = arith.constant 15 : index
    %c0_157 = arith.constant 0 : index
    %c0_158 = arith.constant 0 : index
    %125 = vector.load %arg4[%c0_156, %c15, %c0_157, %c0_158] : memref<1x16x8x8xf32, #tpu.memory_space<vmem>>, vector<1x1x8x8xf32>
    %126 = vector.shape_cast %125 : vector<1x1x8x8xf32> to vector<8x8xf32>
    %127 = vector.shape_cast %124 : vector<8x8xf32> to vector<1x1x8x8xf32>
    tpu.vector_store %arg4[%c0_156, %c15, %c0_157, %c0_158], %127 {strides = array<i32>} : memref<1x16x8x8xf32, #tpu.memory_space<vmem>>, vector<1x1x8x8xf32>,
    return
  }
  func.func @transform_0(%arg0: i32) -> (i32, i32, i32, i32) {
    %c0_i32 = arith.constant 0 : i32
    %c0_i32_0 = arith.constant 0 : i32
    %c0_i32_1 = arith.constant 0 : i32
    %c0_i32_2 = arith.constant 0 : i32
    return %arg0, %c0_i32, %c0_i32_0, %c0_i32_1 : i32, i32, i32, i32
  }
  func.func @transform_1(%arg0: i32) -> (i32, i32, i32) {
    %c0_i32 = arith.constant 0 : i32
    %c0_i32_0 = arith.constant 0 : i32
    %c0_i32_1 = arith.constant 0 : i32
    %c0_i32_2 = arith.constant 0 : i32
    return %c0_i32, %c0_i32_0, %c0_i32_1 : i32, i32, i32
  }
  func.func @transform_2(%arg0: i32) -> (i32, i32, i32) {
    %c0_i32 = arith.constant 0 : i32
    %c0_i32_0 = arith.constant 0 : i32
    %c0_i32_1 = arith.constant 0 : i32
    %c0_i32_2 = arith.constant 0 : i32
    return %c0_i32, %c0_i32_0, %c0_i32_1 : i32, i32, i32
  }
  func.func @transform_3(%arg0: i32) -> (i32, i32, i32, i32) {
    %c0_i32 = arith.constant 0 : i32
    %c0_i32_0 = arith.constant 0 : i32
    %c0_i32_1 = arith.constant 0 : i32
    %c0_i32_2 = arith.constant 0 : i32
    return %arg0, %c0_i32, %c0_i32_0, %c0_i32_1 : i32, i32, i32, i32
  }
}

</mosaic_0001>

<llo_original>
// kernel: tpu_custom_call.1
$region0: #{tpu_custom_call.1}
  #allocation0 [shape = 'u32[]', space=smem, size = 0x4, offset = 0x4, fixed_abs, tag = 'smem constant byte address 0x4 - core index']
  #allocation1 [shape = 'u32[72,128]{1,0:T(1,128)}', space=vmem, size = 0x9000, scoped, tag = 'internal scratch']
  %s0 = inlined_call_operand.hbm [shape: f32[2,4,16,16], index: 0, kind: input, shape index: {}]
  %s1 = inlined_call_operand.vmem [shape: f32[2,8,16], index: 1, kind: input, shape index: {}]
  %s2 = inlined_call_operand.vmem [shape: f32[2,16,8], index: 2, kind: input, shape index: {}]
  %s3 = inlined_call_operand.vmem [shape: f32[2,16,8,8], index: 3, kind: output, shape index: {}]
  %s4 = sld [smem:[#allocation0]]
  $region49: #{tpu_custom_call.1} parent=0
    _
  %s6 = ssub.s32 1, %s4
  %s7 = scalar_select 0, %s6, %s4
  $region1: #{tpu_custom_call.1} parent=0
    #allocation2 [shape = 'u8[65536]{0}', space=vmem, size = 0x10000, scoped, tag = 'input window, operand 0']
    #allocation3 [shape = 's32[2]{0}', space=sflag, size = 0x8, scoped, tag = 'scoped memory for tpu_custom_call.1']
    %8 = vsyncpa [#allocation3], 0
    %s9 = scalar_lea.sflag [#allocation3], 1
    %10 = vsyncpa %s9, 0
    loop: start=0, step=1, limit=4
    $region2: #{tpu_custom_call.1} parent=1 // loop_pre_header
      _
    $region3: #{tpu_custom_call.1} parent=1 // loop_header
      %s12 = sphi 0, %s16
      %p13 = scmp.ge.s32.totalorder %s12, 4
      %s22 = sphi 0, %s24
      %s25 = sphi 0, %s22
      %s26 = sphi 0, %s25
      %s42 = sphi 0, %s26
      %s46 = sphi 0, %s46
      %s48 = sphi 0, %s46
      %s49 = sphi 0, %s48
      %s63 = sphi 0, %s49
      %s67 = sphi 0, %s67
      %s69 = sphi 0, %s67
      %s70 = sphi 0, %s69
      %s84 = sphi 0, %s70
      %s90 = sphi 0, %s92
      %s93 = sphi 0, %s90
      %s94 = sphi 0, %s93
      %s110 = sphi 0, %s94
    $region4: #{tpu_custom_call.1} parent=1 // loop_header_branch
      %15 = sbr.rel (%p13) target = $region8
    $region5: #{tpu_custom_call.1} parent=1 // loop_body
      %s17 = ssub.s32 %s12, 1
      %s18 = ssub.s32 %s12, 2
      %s19 = sadd.s32 %s12, 1
      %s20 = ssub.s32 %s12, %s19
      %p21 = scmp.eq.s32.totalorder %s20, 0
      %s23 = sadd.s32 %s22, 1
      %s24 = scalar_select %p21, %s22, %s23
      %p27 = pneg %p21
      %p28 = scmp.eq.s32.totalorder %s12, 1
      %p29 = por %p27, %p28
      %p30 = scmp.ne.s32.totalorder %s22, %s25
      %p31 = scmp.eq.s32.totalorder %s12, 0
      %p32 = por %p30, %p31
      %p33 = scmp.ne.s32.totalorder %s22, %s25
      %p34 = scmp.eq.s32.totalorder %s17, 1
      %p35 = por %p33, %p34
      %p36 = scmp.ne.s32.totalorder %s25, %s26
      %p37 = scmp.eq.s32.totalorder %s17, 0
      %p38 = por %p36, %p37
      %p39 = scmp.ne.s32.totalorder %s25, %s26
      %p40 = scmp.eq.s32.totalorder %s18, 1
      %p41 = por %p39, %p40
      %p43 = scmp.ne.s32.totalorder %s26, %s42
      %p44 = scmp.eq.s32.totalorder %s18, 0
      %p45 = por %p43, %p44
      %s47 = sadd.s32 %s46, 1
      %p50 = scmp.eq.s32.totalorder %s12, 1
      %p51 = scmp.ne.s32.totalorder %s46, %s48
      %p52 = scmp.eq.s32.totalorder %s12, 0
      %p53 = por %p51, %p52
      %p54 = scmp.ne.s32.totalorder %s46, %s48
      %p55 = scmp.eq.s32.totalorder %s17, 1
      %p56 = por %p54, %p55
      %p57 = scmp.ne.s32.totalorder %s48, %s49
      %p58 = scmp.eq.s32.totalorder %s17, 0
      %p59 = por %p57, %p58
      %p60 = scmp.ne.s32.totalorder %s48, %s49
      %p61 = scmp.eq.s32.totalorder %s18, 1
      %p62 = por %p60, %p61
      %p64 = scmp.ne.s32.totalorder %s49, %s63
      %p65 = scmp.eq.s32.totalorder %s18, 0
      %p66 = por %p64, %p65
      %s68 = sadd.s32 %s67, 1
      %p71 = scmp.eq.s32.totalorder %s12, 1
      %p72 = scmp.ne.s32.totalorder %s67, %s69
      %p73 = scmp.eq.s32.totalorder %s12, 0
      %p74 = por %p72, %p73
      %p75 = scmp.ne.s32.totalorder %s67, %s69
      %p76 = scmp.eq.s32.totalorder %s17, 1
      %p77 = por %p75, %p76
      %p78 = scmp.ne.s32.totalorder %s69, %s70
      %p79 = scmp.eq.s32.totalorder %s17, 0
      %p80 = por %p78, %p79
      %p81 = scmp.ne.s32.totalorder %s69, %s70
      %p82 = scmp.eq.s32.totalorder %s18, 1
      %p83 = por %p81, %p82
      %p85 = scmp.ne.s32.totalorder %s70, %s84
      %p86 = scmp.eq.s32.totalorder %s18, 0
      %p87 = por %p85, %p86
      %s88 = ssub.s32 %s12, %s19
      %p89 = scmp.eq.s32.totalorder %s88, 0
      %s91 = sadd.s32 %s90, 1
      %s92 = scalar_select %p89, %s90, %s91
      %p95 = pneg %p89
      %p96 = scmp.eq.s32.totalorder %s12, 1
      %p97 = por %p95, %p96
      %p98 = scmp.ne.s32.totalorder %s90, %s93
      %p99 = scmp.eq.s32.totalorder %s12, 0
      %p100 = por %p98, %p99
      %p101 = scmp.ne.s32.totalorder %s90, %s93
      %p102 = scmp.eq.s32.totalorder %s17, 1
      %p103 = por %p101, %p102
      %p104 = scmp.ne.s32.totalorder %s93, %s94
      %p105 = scmp.eq.s32.totalorder %s17, 0
      %p106 = por %p104, %p105
      %p107 = scmp.ne.s32.totalorder %s93, %s94
      %p108 = scmp.eq.s32.totalorder %s18, 1
      %p109 = por %p107, %p108
      %p111 = scmp.ne.s32.totalorder %s94, %s110
      %p112 = scmp.eq.s32.totalorder %s18, 0
      %p113 = por %p111, %p112
      %p114 = scmp.le.s32.totalorder 1, %s12
      %p115 = scmp.lt.s32.totalorder %s12, 3
      %p116 = pnand %p114, %p115
      %p117 = pneg %p116
      // Predicated region
      $region9: #{tpu_custom_call.1} parent=5 // pred_check
        _
      $region10: #{tpu_custom_call.1} parent=5 // pred_check_branch
        %119 = sbr.rel (%p116) target = $region12
      $region11: #{tpu_custom_call.1} parent=5 // pred_region
        %s120 = ssub.s32 %s12, 1
        // Predicated region
        $region13: #{tpu_custom_call.1} parent=11 // pred_check
          %p121 = pneg %p59
        $region14: #{tpu_custom_call.1} parent=11 // pred_check_branch
          %123 = sbr.rel (%p121) target = $region16
        $region15: #{tpu_custom_call.1} parent=11 // pred_region
          _
        $region16: #{tpu_custom_call.1} parent=11 // pred_fallthru
          _
        // Predicated region
        $region17: #{tpu_custom_call.1} parent=11 // pred_check
          %p124 = pneg %p80
        $region18: #{tpu_custom_call.1} parent=11 // pred_check_branch
          %126 = sbr.rel (%p124) target = $region20
        $region19: #{tpu_custom_call.1} parent=11 // pred_region
          _
        $region20: #{tpu_custom_call.1} parent=11 // pred_fallthru
          _
      $region12: #{tpu_custom_call.1} parent=5 // pred_fallthru
        _
      %p127 = scmp.lt.s32.totalorder %s12, 2
      // Predicated region
      $region21: #{tpu_custom_call.1} parent=5 // pred_check
        %p128 = pneg %p127
      $region22: #{tpu_custom_call.1} parent=5 // pred_check_branch
        %130 = sbr.rel (%p128) target = $region24
      $region23: #{tpu_custom_call.1} parent=5 // pred_region
        // Predicated region
        $region25: #{tpu_custom_call.1} parent=23 // pred_check
          %p131 = pneg %p32
        $region26: #{tpu_custom_call.1} parent=23 // pred_check_branch
          %133 = sbr.rel (%p131) target = $region28
        $region27: #{tpu_custom_call.1} parent=23 // pred_region
          %s134 = sand.u32 %s22, 1
          %s135 = scalar_lea.sflag [#allocation3], %s134
          %s136 = sand.u32 %s22, 1
          %s137 = smul.addr %s136, 64
          %s138 = scalar_lea.vmem [#allocation2], %s137
          %140 = vsyncadd %s135, 0
          %s141 = smul.addr %s12, 8
          %s142 = smul.addr %s141, 8
          %s143 = scalar_lea.hbm %s0, %s142
          %s144 = sshll.u32 %s143, 4
          %s145 = int_to_ptr.hbm [resolvable:$true] %s144
          %s146 = sshll.u32 %s138, 4
          %s147 = int_to_ptr.vmem [resolvable:$true] %s146
          %152 = dma.hbm_to_vmem [thread:$0]  %s145, 1024, %s147, %s135, 128, 128, 8
        $region28: #{tpu_custom_call.1} parent=23 // pred_fallthru
          _
      $region24: #{tpu_custom_call.1} parent=5 // pred_fallthru
        _
      %p153 = scmp.le.s32.totalorder 1, %s12
      %p154 = scmp.lt.s32.totalorder %s12, 3
      %p155 = pnand %p153, %p154
      %p156 = pneg %p155
      // Predicated region
      $region29: #{tpu_custom_call.1} parent=5 // pred_check
        _
      $region30: #{tpu_custom_call.1} parent=5 // pred_check_branch
        %158 = sbr.rel (%p155) target = $region32
      $region31: #{tpu_custom_call.1} parent=5 // pred_region
        %s159 = ssub.s32 %s12, 1
        %s160 = sand.u32 %s25, 1
        %s161 = scalar_lea.sflag [#allocation3], %s160
        %s162 = sand.u32 %s25, 1
        %s163 = smul.addr %s162, 64
        %s164 = scalar_lea.vmem [#allocation2], %s163
        // Predicated region
        $region33: #{tpu_custom_call.1} parent=31 // pred_check
          %p165 = pneg %p38
        $region34: #{tpu_custom_call.1} parent=31 // pred_check_branch
          %167 = sbr.rel (%p165) target = $region36
        $region35: #{tpu_custom_call.1} parent=31 // pred_region
          %169 = dma.done %s161, 1024
        $region36: #{tpu_custom_call.1} parent=31 // pred_fallthru
          _
        %s170 = sand.u32 %s25, 1
        %s171 = scalar_lea.sflag [#allocation3], %s170
        %s172 = sand.u32 %s25, 1
        %s173 = smul.addr %s172, 64
        %s174 = scalar_lea.vmem [#allocation2], %s173
        %p175 = pneg %p38
        %p176 = pneg %p35
        %p177 = pneg %p59
        %p178 = pneg %p56
        %p179 = pneg %p80
        %p180 = pneg %p77
        %p181 = pneg %p106
        %p182 = pneg %p103
        %p183 = scmp.lt.s32.totalorder %s17, 1
        %s184 = scalar_select %p183, %s17, 1
        %s185 = smul.addr %s184, 16
        %s186 = smul.addr %s185, 8
        %s187 = scalar_lea.vmem %s3, %s186
        %p188 = scmp.lt.s32.totalorder %s17, 1
        %s189 = scalar_select %p188, %s17, 1
        %s190 = smul.addr %s189, 16
        %s191 = smul.addr %s190, 8
        %s192 = scalar_lea.vmem %s3, %s191
        %v193 = vld [vmem:[%s164] sm:$0xff]
        %v194 = vld [vmem:[%s164 + $0x8] sm:$0xff]
        %v195 = vld [vmem:[%s1] sm:$0xff]
        %vm196 = vcmask 130048
        %v198 = vsel %vm196, %v195, 0
        %200 = vmatpush.msra.mxu0 0.0
        %201 = vmatpush.msra.mxu0 0.0
        %202 = vmatpush.msra.mxu0 0.0
        %203 = vmatpush.msra.mxu0 0.0
        %204 = vmatpush.msra.mxu0 0.0
        %205 = vmatpush.msra.mxu0 0.0
        %206 = vmatpush.msra.mxu0 0.0
        %207 = vmatpush.msra.mxu0 0.0
        %208 = vmatpush.msra.mxu0 0.0
        %209 = vmatpush.msra.mxu0 0.0
        %210 = vmatpush.msra.mxu0 0.0
        %211 = vmatpush.msra.mxu0 0.0
        %212 = vmatpush.msra.mxu0 0.0
        %213 = vmatpush.msra.mxu0 0.0
        %214 = vmatpush.msra.mxu0 %v194
        %215 = vmatpush.msra.mxu0 %v193
        %216 = vmatmul.f32.gmra.mxu0 %v198
        %v217 = vpop.f32.mrf.mxu0
        %v218 = vadd.f32 0.0, %v217
        %219 = vdwg.mxu0
        %v220 = vld [vmem:[%s2] sm:$0xff]
        %v221 = vld [vmem:[%s2 + $0x8] sm:$0xff]
        %v223 = vsel %vm196, %v218, 0
        %225 = vmatpush.msra.mxu0 0.0
        %226 = vmatpush.msra.mxu0 0.0
        %227 = vmatpush.msra.mxu0 0.0
        %228 = vmatpush.msra.mxu0 0.0
        %229 = vmatpush.msra.mxu0 0.0
        %230 = vmatpush.msra.mxu0 0.0
        %231 = vmatpush.msra.mxu0 0.0
        %232 = vmatpush.msra.mxu0 0.0
        %233 = vmatpush.msra.mxu0 0.0
        %234 = vmatpush.msra.mxu0 0.0
        %235 = vmatpush.msra.mxu0 0.0
        %236 = vmatpush.msra.mxu0 0.0
        %237 = vmatpush.msra.mxu0 0.0
        %238 = vmatpush.msra.mxu0 0.0
        %239 = vmatpush.msra.mxu0 %v221
        %240 = vmatpush.msra.mxu0 %v220
        %241 = vmatmul.f32.gmra.mxu0 %v223
        %v242 = vpop.f32.mrf.mxu0
        %v243 = vadd.f32 0.0, %v242
        %244 = vdwg.mxu0
        %vm245 = vcmask 64512
        %246 = vst.msk [vmem:[%s192] sm:$0xff] %vm245, %v243
        %s247 = scalar_lea.vmem %s2, 16
        %v248 = vld [vmem:[%s247] sm:$0xff]
        %v249 = vld [vmem:[%s247 + $0x8] sm:$0xff]
        %250 = vmatpush.msra.mxu0 0.0
        %251 = vmatpush.msra.mxu0 0.0
        %252 = vmatpush.msra.mxu0 0.0
        %253 = vmatpush.msra.mxu0 0.0
        %254 = vmatpush.msra.mxu0 0.0
        %255 = vmatpush.msra.mxu0 0.0
        %256 = vmatpush.msra.mxu0 0.0
        %257 = vmatpush.msra.mxu0 0.0
        %258 = vmatpush.msra.mxu0 0.0
        %259 = vmatpush.msra.mxu0 0.0
        %260 = vmatpush.msra.mxu0 0.0
        %261 = vmatpush.msra.mxu0 0.0
        %262 = vmatpush.msra.mxu0 0.0
        %263 = vmatpush.msra.mxu0 0.0
        %264 = vmatpush.msra.mxu0 %v249
        %265 = vmatpush.msra.mxu0 %v248
        %266 = vmatmul.f32.gmra.mxu0 %v223
        %v267 = vpop.f32.mrf.mxu0
        %v268 = vadd.f32 0.0, %v267
        %269 = vdwg.mxu0
        %s270 = scalar_lea.vmem %s192, 8
        %271 = vst.msk [vmem:[%s270] sm:$0xff] %vm245, %v268
        %s272 = scalar_lea.vmem %s1, 8
        %v273 = vld [vmem:[%s272] sm:$0xff]
        %v275 = vsel %vm196, %v273, 0
        %277 = vmatpush.msra.mxu0 0.0
        %278 = vmatpush.msra.mxu0 0.0
        %279 = vmatpush.msra.mxu0 0.0
        %280 = vmatpush.msra.mxu0 0.0
        %281 = vmatpush.msra.mxu0 0.0
        %282 = vmatpush.msra.mxu0 0.0
        %283 = vmatpush.msra.mxu0 0.0
        %284 = vmatpush.msra.mxu0 0.0
        %285 = vmatpush.msra.mxu0 0.0
        %286 = vmatpush.msra.mxu0 0.0
        %287 = vmatpush.msra.mxu0 0.0
        %288 = vmatpush.msra.mxu0 0.0
        %289 = vmatpush.msra.mxu0 0.0
        %290 = vmatpush.msra.mxu0 0.0
        %291 = vmatpush.msra.mxu0 %v194
        %292 = vmatpush.msra.mxu0 %v193
        %293 = vmatmul.f32.gmra.mxu0 %v275
        %v294 = vpop.f32.mrf.mxu0
        %v295 = vadd.f32 0.0, %v294
        %296 = vdwg.mxu0
        %v297 = vld [vmem:[%s2] sm:$0xff]
        %v298 = vld [vmem:[%s2 + $0x8] sm:$0xff]
        %v300 = vsel %vm196, %v295, 0
        %302 = vmatpush.msra.mxu0 0.0
        %303 = vmatpush.msra.mxu0 0.0
        %304 = vmatpush.msra.mxu0 0.0
        %305 = vmatpush.msra.mxu0 0.0
        %306 = vmatpush.msra.mxu0 0.0
        %307 = vmatpush.msra.mxu0 0.0
        %308 = vmatpush.msra.mxu0 0.0
        %309 = vmatpush.msra.mxu0 0.0
        %310 = vmatpush.msra.mxu0 0.0
        %311 = vmatpush.msra.mxu0 0.0
        %312 = vmatpush.msra.mxu0 0.0
        %313 = vmatpush.msra.mxu0 0.0
        %314 = vmatpush.msra.mxu0 0.0
        %315 = vmatpush.msra.mxu0 0.0
        %316 = vmatpush.msra.mxu0 %v298
        %317 = vmatpush.msra.mxu0 %v297
        %318 = vmatmul.f32.gmra.mxu0 %v300
        %v319 = vpop.f32.mrf.mxu0
        %v320 = vadd.f32 0.0, %v319
        %321 = vdwg.mxu0
        %s322 = scalar_lea.vmem %s192, 16
        %323 = vst.msk [vmem:[%s322] sm:$0xff] %vm245, %v320
        %v324 = vld [vmem:[%s247] sm:$0xff]
        %v325 = vld [vmem:[%s247 + $0x8] sm:$0xff]
        %326 = vmatpush.msra.mxu0 0.0
        %327 = vmatpush.msra.mxu0 0.0
        %328 = vmatpush.msra.mxu0 0.0
        %329 = vmatpush.msra.mxu0 0.0
        %330 = vmatpush.msra.mxu0 0.0
        %331 = vmatpush.msra.mxu0 0.0
        %332 = vmatpush.msra.mxu0 0.0
        %333 = vmatpush.msra.mxu0 0.0
        %334 = vmatpush.msra.mxu0 0.0
        %335 = vmatpush.msra.mxu0 0.0
        %336 = vmatpush.msra.mxu0 0.0
        %337 = vmatpush.msra.mxu0 0.0
        %338 = vmatpush.msra.mxu0 0.0
        %339 = vmatpush.msra.mxu0 0.0
        %340 = vmatpush.msra.mxu0 %v325
        %341 = vmatpush.msra.mxu0 %v324
        %342 = vmatmul.f32.gmra.mxu0 %v300
        %v343 = vpop.f32.mrf.mxu0
        %v344 = vadd.f32 0.0, %v343
        %345 = vdwg.mxu0
        %s346 = scalar_lea.vmem %s192, 24
        %347 = vst.msk [vmem:[%s346] sm:$0xff] %vm245, %v344
        %s348 = scalar_lea.vmem %s164, 16 [#allocation2]
        %v349 = vld [vmem:[%s348] sm:$0xff]
        %v350 = vld [vmem:[%s348 + $0x8] sm:$0xff]
        %v351 = vld [vmem:[%s1] sm:$0xff]
        %v353 = vsel %vm196, %v351, 0
        %355 = vmatpush.msra.mxu0 0.0
        %356 = vmatpush.msra.mxu0 0.0
        %357 = vmatpush.msra.mxu0 0.0
        %358 = vmatpush.msra.mxu0 0.0
        %359 = vmatpush.msra.mxu0 0.0
        %360 = vmatpush.msra.mxu0 0.0
        %361 = vmatpush.msra.mxu0 0.0
        %362 = vmatpush.msra.mxu0 0.0
        %363 = vmatpush.msra.mxu0 0.0
        %364 = vmatpush.msra.mxu0 0.0
        %365 = vmatpush.msra.mxu0 0.0
        %366 = vmatpush.msra.mxu0 0.0
        %367 = vmatpush.msra.mxu0 0.0
        %368 = vmatpush.msra.mxu0 0.0
        %369 = vmatpush.msra.mxu0 %v350
        %370 = vmatpush.msra.mxu0 %v349
        %371 = vmatmul.f32.gmra.mxu0 %v353
        %v372 = vpop.f32.mrf.mxu0
        %v373 = vadd.f32 0.0, %v372
        %374 = vdwg.mxu0
        %v375 = vld [vmem:[%s2] sm:$0xff]
        %v376 = vld [vmem:[%s2 + $0x8] sm:$0xff]
        %v378 = vsel %vm196, %v373, 0
        %380 = vmatpush.msra.mxu0 0.0
        %381 = vmatpush.msra.mxu0 0.0
        %382 = vmatpush.msra.mxu0 0.0
        %383 = vmatpush.msra.mxu0 0.0
        %384 = vmatpush.msra.mxu0 0.0
        %385 = vmatpush.msra.mxu0 0.0
        %386 = vmatpush.msra.mxu0 0.0
        %387 = vmatpush.msra.mxu0 0.0
        %388 = vmatpush.msra.mxu0 0.0
        %389 = vmatpush.msra.mxu0 0.0
        %390 = vmatpush.msra.mxu0 0.0
        %391 = vmatpush.msra.mxu0 0.0
        %392 = vmatpush.msra.mxu0 0.0
        %393 = vmatpush.msra.mxu0 0.0
        %394 = vmatpush.msra.mxu0 %v376
        %395 = vmatpush.msra.mxu0 %v375
        %396 = vmatmul.f32.gmra.mxu0 %v378
        %v397 = vpop.f32.mrf.mxu0
        %v398 = vadd.f32 0.0, %v397
        %399 = vdwg.mxu0
        %s400 = scalar_lea.vmem %s192, 32
        %401 = vst.msk [vmem:[%s400] sm:$0xff] %vm245, %v398
        %v402 = vld [vmem:[%s247] sm:$0xff]
        %v403 = vld [vmem:[%s247 + $0x8] sm:$0xff]
        %404 = vmatpush.msra.mxu0 0.0
        %405 = vmatpush.msra.mxu0 0.0
        %406 = vmatpush.msra.mxu0 0.0
        %407 = vmatpush.msra.mxu0 0.0
        %408 = vmatpush.msra.mxu0 0.0
        %409 = vmatpush.msra.mxu0 0.0
        %410 = vmatpush.msra.mxu0 0.0
        %411 = vmatpush.msra.mxu0 0.0
        %412 = vmatpush.msra.mxu0 0.0
        %413 = vmatpush.msra.mxu0 0.0
        %414 = vmatpush.msra.mxu0 0.0
        %415 = vmatpush.msra.mxu0 0.0
        %416 = vmatpush.msra.mxu0 0.0
        %417 = vmatpush.msra.mxu0 0.0
        %418 = vmatpush.msra.mxu0 %v403
        %419 = vmatpush.msra.mxu0 %v402
        %420 = vmatmul.f32.gmra.mxu0 %v378
        %v421 = vpop.f32.mrf.mxu0
        %v422 = vadd.f32 0.0, %v421
        %423 = vdwg.mxu0
        %s424 = scalar_lea.vmem %s192, 40
        %425 = vst.msk [vmem:[%s424] sm:$0xff] %vm245, %v422
        %v426 = vld [vmem:[%s272] sm:$0xff]
        %v428 = vsel %vm196, %v426, 0
        %430 = vmatpush.msra.mxu0 0.0
        %431 = vmatpush.msra.mxu0 0.0
        %432 = vmatpush.msra.mxu0 0.0
        %433 = vmatpush.msra.mxu0 0.0
        %434 = vmatpush.msra.mxu0 0.0
        %435 = vmatpush.msra.mxu0 0.0
        %436 = vmatpush.msra.mxu0 0.0
        %437 = vmatpush.msra.mxu0 0.0
        %438 = vmatpush.msra.mxu0 0.0
        %439 = vmatpush.msra.mxu0 0.0
        %440 = vmatpush.msra.mxu0 0.0
        %441 = vmatpush.msra.mxu0 0.0
        %442 = vmatpush.msra.mxu0 0.0
        %443 = vmatpush.msra.mxu0 0.0
        %444 = vmatpush.msra.mxu0 %v350
        %445 = vmatpush.msra.mxu0 %v349
        %446 = vmatmul.f32.gmra.mxu0 %v428
        %v447 = vpop.f32.mrf.mxu0
        %v448 = vadd.f32 0.0, %v447
        %449 = vdwg.mxu0
        %v450 = vld [vmem:[%s2] sm:$0xff]
        %v451 = vld [vmem:[%s2 + $0x8] sm:$0xff]
        %v453 = vsel %vm196, %v448, 0
        %455 = vmatpush.msra.mxu0 0.0
        %456 = vmatpush.msra.mxu0 0.0
        %457 = vmatpush.msra.mxu0 0.0
        %458 = vmatpush.msra.mxu0 0.0
        %459 = vmatpush.msra.mxu0 0.0
        %460 = vmatpush.msra.mxu0 0.0
        %461 = vmatpush.msra.mxu0 0.0
        %462 = vmatpush.msra.mxu0 0.0
        %463 = vmatpush.msra.mxu0 0.0
        %464 = vmatpush.msra.mxu0 0.0
        %465 = vmatpush.msra.mxu0 0.0
        %466 = vmatpush.msra.mxu0 0.0
        %467 = vmatpush.msra.mxu0 0.0
        %468 = vmatpush.msra.mxu0 0.0
        %469 = vmatpush.msra.mxu0 %v451
        %470 = vmatpush.msra.mxu0 %v450
        %471 = vmatmul.f32.gmra.mxu0 %v453
        %v472 = vpop.f32.mrf.mxu0
        %v473 = vadd.f32 0.0, %v472
        %474 = vdwg.mxu0
        %s475 = scalar_lea.vmem %s192, 48
        %476 = vst.msk [vmem:[%s475] sm:$0xff] %vm245, %v473
        %v477 = vld [vmem:[%s247] sm:$0xff]
        %v478 = vld [vmem:[%s247 + $0x8] sm:$0xff]
        %479 = vmatpush.msra.mxu0 0.0
        %480 = vmatpush.msra.mxu0 0.0
        %481 = vmatpush.msra.mxu0 0.0
        %482 = vmatpush.msra.mxu0 0.0
        %483 = vmatpush.msra.mxu0 0.0
        %484 = vmatpush.msra.mxu0 0.0
        %485 = vmatpush.msra.mxu0 0.0
        %486 = vmatpush.msra.mxu0 0.0
        %487 = vmatpush.msra.mxu0 0.0
        %488 = vmatpush.msra.mxu0 0.0
        %489 = vmatpush.msra.mxu0 0.0
        %490 = vmatpush.msra.mxu0 0.0
        %491 = vmatpush.msra.mxu0 0.0
        %492 = vmatpush.msra.mxu0 0.0
        %493 = vmatpush.msra.mxu0 %v478
        %494 = vmatpush.msra.mxu0 %v477
        %495 = vmatmul.f32.gmra.mxu0 %v453
        %v496 = vpop.f32.mrf.mxu0
        %v497 = vadd.f32 0.0, %v496
        %498 = vdwg.mxu0
        %s499 = scalar_lea.vmem %s192, 56
        %500 = vst.msk [vmem:[%s499] sm:$0xff] %vm245, %v497
        %s501 = scalar_lea.vmem %s164, 32 [#allocation2]
        %v502 = vld [vmem:[%s501] sm:$0xff]
        %v503 = vld [vmem:[%s501 + $0x8] sm:$0xff]
        %v504 = vld [vmem:[%s1] sm:$0xff]
        %v506 = vsel %vm196, %v504, 0
        %508 = vmatpush.msra.mxu0 0.0
        %509 = vmatpush.msra.mxu0 0.0
        %510 = vmatpush.msra.mxu0 0.0
        %511 = vmatpush.msra.mxu0 0.0
        %512 = vmatpush.msra.mxu0 0.0
        %513 = vmatpush.msra.mxu0 0.0
        %514 = vmatpush.msra.mxu0 0.0
        %515 = vmatpush.msra.mxu0 0.0
        %516 = vmatpush.msra.mxu0 0.0
        %517 = vmatpush.msra.mxu0 0.0
        %518 = vmatpush.msra.mxu0 0.0
        %519 = vmatpush.msra.mxu0 0.0
        %520 = vmatpush.msra.mxu0 0.0
        %521 = vmatpush.msra.mxu0 0.0
        %522 = vmatpush.msra.mxu0 %v503
        %523 = vmatpush.msra.mxu0 %v502
        %524 = vmatmul.f32.gmra.mxu0 %v506
        %v525 = vpop.f32.mrf.mxu0
        %v526 = vadd.f32 0.0, %v525
        %527 = vdwg.mxu0
        %v528 = vld [vmem:[%s2] sm:$0xff]
        %v529 = vld [vmem:[%s2 + $0x8] sm:$0xff]
        %v531 = vsel %vm196, %v526, 0
        %533 = vmatpush.msra.mxu0 0.0
        %534 = vmatpush.msra.mxu0 0.0
        %535 = vmatpush.msra.mxu0 0.0
        %536 = vmatpush.msra.mxu0 0.0
        %537 = vmatpush.msra.mxu0 0.0
        %538 = vmatpush.msra.mxu0 0.0
        %539 = vmatpush.msra.mxu0 0.0
        %540 = vmatpush.msra.mxu0 0.0
        %541 = vmatpush.msra.mxu0 0.0
        %542 = vmatpush.msra.mxu0 0.0
        %543 = vmatpush.msra.mxu0 0.0
        %544 = vmatpush.msra.mxu0 0.0
        %545 = vmatpush.msra.mxu0 0.0
        %546 = vmatpush.msra.mxu0 0.0
        %547 = vmatpush.msra.mxu0 %v529
        %548 = vmatpush.msra.mxu0 %v528
        %549 = vmatmul.f32.gmra.mxu0 %v531
        %v550 = vpop.f32.mrf.mxu0
        %v551 = vadd.f32 0.0, %v550
        %552 = vdwg.mxu0
        %s553 = scalar_lea.vmem %s192, 64
        %554 = vst.msk [vmem:[%s553] sm:$0xff] %vm245, %v551
        %v555 = vld [vmem:[%s247] sm:$0xff]
        %v556 = vld [vmem:[%s247 + $0x8] sm:$0xff]
        %557 = vmatpush.msra.mxu0 0.0
        %558 = vmatpush.msra.mxu0 0.0
        %559 = vmatpush.msra.mxu0 0.0
        %560 = vmatpush.msra.mxu0 0.0
        %561 = vmatpush.msra.mxu0 0.0
        %562 = vmatpush.msra.mxu0 0.0
        %563 = vmatpush.msra.mxu0 0.0
        %564 = vmatpush.msra.mxu0 0.0
        %565 = vmatpush.msra.mxu0 0.0
        %566 = vmatpush.msra.mxu0 0.0
        %567 = vmatpush.msra.mxu0 0.0
        %568 = vmatpush.msra.mxu0 0.0
        %569 = vmatpush.msra.mxu0 0.0
        %570 = vmatpush.msra.mxu0 0.0
        %571 = vmatpush.msra.mxu0 %v556
        %572 = vmatpush.msra.mxu0 %v555
        %573 = vmatmul.f32.gmra.mxu0 %v531
        %v574 = vpop.f32.mrf.mxu0
        %v575 = vadd.f32 0.0, %v574
        %576 = vdwg.mxu0
        %s577 = scalar_lea.vmem %s192, 72
        %578 = vst.msk [vmem:[%s577] sm:$0xff] %vm245, %v575
        %v579 = vld [vmem:[%s272] sm:$0xff]
        %v581 = vsel %vm196, %v579, 0
        %583 = vmatpush.msra.mxu0 0.0
        %584 = vmatpush.msra.mxu0 0.0
        %585 = vmatpush.msra.mxu0 0.0
        %586 = vmatpush.msra.mxu0 0.0
        %587 = vmatpush.msra.mxu0 0.0
        %588 = vmatpush.msra.mxu0 0.0
        %589 = vmatpush.msra.mxu0 0.0
        %590 = vmatpush.msra.mxu0 0.0
        %591 = vmatpush.msra.mxu0 0.0
        %592 = vmatpush.msra.mxu0 0.0
        %593 = vmatpush.msra.mxu0 0.0
        %594 = vmatpush.msra.mxu0 0.0
        %595 = vmatpush.msra.mxu0 0.0
        %596 = vmatpush.msra.mxu0 0.0
        %597 = vmatpush.msra.mxu0 %v503
        %598 = vmatpush.msra.mxu0 %v502
        %599 = vmatmul.f32.gmra.mxu0 %v581
        %v600 = vpop.f32.mrf.mxu0
        %v601 = vadd.f32 0.0, %v600
        %602 = vdwg.mxu0
        %v603 = vld [vmem:[%s2] sm:$0xff]
        %v604 = vld [vmem:[%s2 + $0x8] sm:$0xff]
        %v606 = vsel %vm196, %v601, 0
        %608 = vmatpush.msra.mxu0 0.0
        %609 = vmatpush.msra.mxu0 0.0
        %610 = vmatpush.msra.mxu0 0.0
        %611 = vmatpush.msra.mxu0 0.0
        %612 = vmatpush.msra.mxu0 0.0
        %613 = vmatpush.msra.mxu0 0.0
        %614 = vmatpush.msra.mxu0 0.0
        %615 = vmatpush.msra.mxu0 0.0
        %616 = vmatpush.msra.mxu0 0.0
        %617 = vmatpush.msra.mxu0 0.0
        %618 = vmatpush.msra.mxu0 0.0
        %619 = vmatpush.msra.mxu0 0.0
        %620 = vmatpush.msra.mxu0 0.0
        %621 = vmatpush.msra.mxu0 0.0
        %622 = vmatpush.msra.mxu0 %v604
        %623 = vmatpush.msra.mxu0 %v603
        %624 = vmatmul.f32.gmra.mxu0 %v606
        %v625 = vpop.f32.mrf.mxu0
        %v626 = vadd.f32 0.0, %v625
        %627 = vdwg.mxu0
        %s628 = scalar_lea.vmem %s192, 80
        %629 = vst.msk [vmem:[%s628] sm:$0xff] %vm245, %v626
        %v630 = vld [vmem:[%s247] sm:$0xff]
        %v631 = vld [vmem:[%s247 + $0x8] sm:$0xff]
        %632 = vmatpush.msra.mxu0 0.0
        %633 = vmatpush.msra.mxu0 0.0
        %634 = vmatpush.msra.mxu0 0.0
        %635 = vmatpush.msra.mxu0 0.0
        %636 = vmatpush.msra.mxu0 0.0
        %637 = vmatpush.msra.mxu0 0.0
        %638 = vmatpush.msra.mxu0 0.0
        %639 = vmatpush.msra.mxu0 0.0
        %640 = vmatpush.msra.mxu0 0.0
        %641 = vmatpush.msra.mxu0 0.0
        %642 = vmatpush.msra.mxu0 0.0
        %643 = vmatpush.msra.mxu0 0.0
        %644 = vmatpush.msra.mxu0 0.0
        %645 = vmatpush.msra.mxu0 0.0
        %646 = vmatpush.msra.mxu0 %v631
        %647 = vmatpush.msra.mxu0 %v630
        %648 = vmatmul.f32.gmra.mxu0 %v606
        %v649 = vpop.f32.mrf.mxu0
        %v650 = vadd.f32 0.0, %v649
        %651 = vdwg.mxu0
        %s652 = scalar_lea.vmem %s192, 88
        %653 = vst.msk [vmem:[%s652] sm:$0xff] %vm245, %v650
        %s654 = scalar_lea.vmem %s164, 48 [#allocation2]
        %v655 = vld [vmem:[%s654] sm:$0xff]
        %v656 = vld [vmem:[%s654 + $0x8] sm:$0xff]
        %v657 = vld [vmem:[%s1] sm:$0xff]
        %v659 = vsel %vm196, %v657, 0
        %661 = vmatpush.msra.mxu0 0.0
        %662 = vmatpush.msra.mxu0 0.0
        %663 = vmatpush.msra.mxu0 0.0
        %664 = vmatpush.msra.mxu0 0.0
        %665 = vmatpush.msra.mxu0 0.0
        %666 = vmatpush.msra.mxu0 0.0
        %667 = vmatpush.msra.mxu0 0.0
        %668 = vmatpush.msra.mxu0 0.0
        %669 = vmatpush.msra.mxu0 0.0
        %670 = vmatpush.msra.mxu0 0.0
        %671 = vmatpush.msra.mxu0 0.0
        %672 = vmatpush.msra.mxu0 0.0
        %673 = vmatpush.msra.mxu0 0.0
        %674 = vmatpush.msra.mxu0 0.0
        %675 = vmatpush.msra.mxu0 %v656
        %676 = vmatpush.msra.mxu0 %v655
        %677 = vmatmul.f32.gmra.mxu0 %v659
        %v678 = vpop.f32.mrf.mxu0
        %v679 = vadd.f32 0.0, %v678
        %680 = vdwg.mxu0
        %v681 = vld [vmem:[%s2] sm:$0xff]
        %v682 = vld [vmem:[%s2 + $0x8] sm:$0xff]
        %v684 = vsel %vm196, %v679, 0
        %686 = vmatpush.msra.mxu0 0.0
        %687 = vmatpush.msra.mxu0 0.0
        %688 = vmatpush.msra.mxu0 0.0
        %689 = vmatpush.msra.mxu0 0.0
        %690 = vmatpush.msra.mxu0 0.0
        %691 = vmatpush.msra.mxu0 0.0
        %692 = vmatpush.msra.mxu0 0.0
        %693 = vmatpush.msra.mxu0 0.0
        %694 = vmatpush.msra.mxu0 0.0
        %695 = vmatpush.msra.mxu0 0.0
        %696 = vmatpush.msra.mxu0 0.0
        %697 = vmatpush.msra.mxu0 0.0
        %698 = vmatpush.msra.mxu0 0.0
        %699 = vmatpush.msra.mxu0 0.0
        %700 = vmatpush.msra.mxu0 %v682
        %701 = vmatpush.msra.mxu0 %v681
        %702 = vmatmul.f32.gmra.mxu0 %v684
        %v703 = vpop.f32.mrf.mxu0
        %v704 = vadd.f32 0.0, %v703
        %705 = vdwg.mxu0
        %s706 = scalar_lea.vmem %s192, 96
        %707 = vst.msk [vmem:[%s706] sm:$0xff] %vm245, %v704
        %v708 = vld [vmem:[%s247] sm:$0xff]
        %v709 = vld [vmem:[%s247 + $0x8] sm:$0xff]
        %710 = vmatpush.msra.mxu0 0.0
        %711 = vmatpush.msra.mxu0 0.0
        %712 = vmatpush.msra.mxu0 0.0
        %713 = vmatpush.msra.mxu0 0.0
        %714 = vmatpush.msra.mxu0 0.0
        %715 = vmatpush.msra.mxu0 0.0
        %716 = vmatpush.msra.mxu0 0.0
        %717 = vmatpush.msra.mxu0 0.0
        %718 = vmatpush.msra.mxu0 0.0
        %719 = vmatpush.msra.mxu0 0.0
        %720 = vmatpush.msra.mxu0 0.0
        %721 = vmatpush.msra.mxu0 0.0
        %722 = vmatpush.msra.mxu0 0.0
        %723 = vmatpush.msra.mxu0 0.0
        %724 = vmatpush.msra.mxu0 %v709
        %725 = vmatpush.msra.mxu0 %v708
        %726 = vmatmul.f32.gmra.mxu0 %v684
        %v727 = vpop.f32.mrf.mxu0
        %v728 = vadd.f32 0.0, %v727
        %729 = vdwg.mxu0
        %s730 = scalar_lea.vmem %s192, 104
        %731 = vst.msk [vmem:[%s730] sm:$0xff] %vm245, %v728
        %v732 = vld [vmem:[%s272] sm:$0xff]
        %v734 = vsel %vm196, %v732, 0
        %736 = vmatpush.msra.mxu0 0.0
        %737 = vmatpush.msra.mxu0 0.0
        %738 = vmatpush.msra.mxu0 0.0
        %739 = vmatpush.msra.mxu0 0.0
        %740 = vmatpush.msra.mxu0 0.0
        %741 = vmatpush.msra.mxu0 0.0
        %742 = vmatpush.msra.mxu0 0.0
        %743 = vmatpush.msra.mxu0 0.0
        %744 = vmatpush.msra.mxu0 0.0
        %745 = vmatpush.msra.mxu0 0.0
        %746 = vmatpush.msra.mxu0 0.0
        %747 = vmatpush.msra.mxu0 0.0
        %748 = vmatpush.msra.mxu0 0.0
        %749 = vmatpush.msra.mxu0 0.0
        %750 = vmatpush.msra.mxu0 %v656
        %751 = vmatpush.msra.mxu0 %v655
        %752 = vmatmul.f32.gmra.mxu0 %v734
        %v753 = vpop.f32.mrf.mxu0
        %v754 = vadd.f32 0.0, %v753
        %755 = vdwg.mxu0
        %v756 = vld [vmem:[%s2] sm:$0xff]
        %v757 = vld [vmem:[%s2 + $0x8] sm:$0xff]
        %v759 = vsel %vm196, %v754, 0
        %761 = vmatpush.msra.mxu0 0.0
        %762 = vmatpush.msra.mxu0 0.0
        %763 = vmatpush.msra.mxu0 0.0
        %764 = vmatpush.msra.mxu0 0.0
        %765 = vmatpush.msra.mxu0 0.0
        %766 = vmatpush.msra.mxu0 0.0
        %767 = vmatpush.msra.mxu0 0.0
        %768 = vmatpush.msra.mxu0 0.0
        %769 = vmatpush.msra.mxu0 0.0
        %770 = vmatpush.msra.mxu0 0.0
        %771 = vmatpush.msra.mxu0 0.0
        %772 = vmatpush.msra.mxu0 0.0
        %773 = vmatpush.msra.mxu0 0.0
        %774 = vmatpush.msra.mxu0 0.0
        %775 = vmatpush.msra.mxu0 %v757
        %776 = vmatpush.msra.mxu0 %v756
        %777 = vmatmul.f32.gmra.mxu0 %v759
        %v778 = vpop.f32.mrf.mxu0
        %v779 = vadd.f32 0.0, %v778
        %780 = vdwg.mxu0
        %s781 = scalar_lea.vmem %s192, 112
        %782 = vst.msk [vmem:[%s781] sm:$0xff] %vm245, %v779
        %v783 = vld [vmem:[%s247] sm:$0xff]
        %v784 = vld [vmem:[%s247 + $0x8] sm:$0xff]
        %785 = vmatpush.msra.mxu0 0.0
        %786 = vmatpush.msra.mxu0 0.0
        %787 = vmatpush.msra.mxu0 0.0
        %788 = vmatpush.msra.mxu0 0.0
        %789 = vmatpush.msra.mxu0 0.0
        %790 = vmatpush.msra.mxu0 0.0
        %791 = vmatpush.msra.mxu0 0.0
        %792 = vmatpush.msra.mxu0 0.0
        %793 = vmatpush.msra.mxu0 0.0
        %794 = vmatpush.msra.mxu0 0.0
        %795 = vmatpush.msra.mxu0 0.0
        %796 = vmatpush.msra.mxu0 0.0
        %797 = vmatpush.msra.mxu0 0.0
        %798 = vmatpush.msra.mxu0 0.0
        %799 = vmatpush.msra.mxu0 %v784
        %800 = vmatpush.msra.mxu0 %v783
        %801 = vmatmul.f32.gmra.mxu0 %v759
        %v802 = vpop.f32.mrf.mxu0
        %v803 = vadd.f32 0.0, %v802
        %804 = vdwg.mxu0
        %s805 = scalar_lea.vmem %s192, 120
        %806 = vst.msk [vmem:[%s805] sm:$0xff] %vm245, %v803
        %p807 = scmp.lt.s32.totalorder %s17, 1
        %s808 = scalar_select %p807, %s17, 1
        %s809 = smul.addr %s808, 16
        %s810 = smul.addr %s809, 8
        %s811 = scalar_lea.vmem %s3, %s810
        // Predicated region
        $region37: #{tpu_custom_call.1} parent=31 // pred_check
          %p812 = pneg %p103
        $region38: #{tpu_custom_call.1} parent=31 // pred_check_branch
          %814 = sbr.rel (%p812) target = $region40
        $region39: #{tpu_custom_call.1} parent=31 // pred_region
          _
        $region40: #{tpu_custom_call.1} parent=31 // pred_fallthru
          _
      $region32: #{tpu_custom_call.1} parent=5 // pred_fallthru
        _
      %p815 = scmp.le.s32.totalorder 2, %s12
      // Predicated region
      $region41: #{tpu_custom_call.1} parent=5 // pred_check
        %p816 = pneg %p815
      $region42: #{tpu_custom_call.1} parent=5 // pred_check_branch
        %818 = sbr.rel (%p816) target = $region44
      $region43: #{tpu_custom_call.1} parent=5 // pred_region
        %s819 = ssub.s32 %s12, 2
        // Predicated region
        $region45: #{tpu_custom_call.1} parent=43 // pred_check
          %p820 = pneg %p109
        $region46: #{tpu_custom_call.1} parent=43 // pred_check_branch
          %822 = sbr.rel (%p820) target = $region48
        $region47: #{tpu_custom_call.1} parent=43 // pred_region
          %p823 = scmp.lt.s32.totalorder %s18, 1
          %s824 = scalar_select %p823, %s18, 1
          %s825 = smul.addr %s824, 16
          %s826 = smul.addr %s825, 8
          %s827 = scalar_lea.vmem %s3, %s826
        $region48: #{tpu_custom_call.1} parent=43 // pred_fallthru
          _
      $region44: #{tpu_custom_call.1} parent=5 // pred_fallthru
        _
    $region6: #{tpu_custom_call.1} parent=1 // loop_footer
      %s16 = sadd.s32 1, %s12
    $region7: #{tpu_custom_call.1} parent=1 // loop_footer_branch
      %11 = sbr.rel target = $region3
    $region8: #{tpu_custom_call.1} parent=1 // loop_exit
      _
    %828 = vsyncpa [#allocation3], 1
    %s829 = scalar_lea.sflag [#allocation3], 1
    %830 = vsyncpa %s829, 1

</llo_original>
